<compile_context>
chip_gen: v6e
topology: v6e:2x2x1
jax: 0.10.0
libtpu: 0.0.40
codegen_flags: <defaults>
</compile_context>

<pallas_src>
import functools

import jax
import jax.numpy as jnp
from jax import lax
from jax.experimental import pallas as pl
from jax.experimental.pallas import tpu as pltpu


def _fc_kernel(x_ref, w_ref, b_ref, o_ref, acc_ref, *, apply_relu: bool):
    # x_ref: (tm, tk) activations tile
    # w_ref: (tn, tk) weight tile in PyTorch [out, in] layout
    # b_ref: (1, tn)  bias tile
    # o_ref: (tm, tn) output tile
    # acc_ref: (tm, tn) f32 accumulator scratch, resident across the K grid axis
    k = pl.program_id(2)

    @pl.when(k == 0)
    def _():
        acc_ref[...] = jnp.zeros_like(acc_ref)

    # x @ W.T : contract last dim of x (IN) with last dim of w (IN) on the MXU.
    acc_ref[...] += lax.dot_general(
        x_ref[...],
        w_ref[...],
        dimension_numbers=(((1,), (1,)), ((), ())),
        preferred_element_type=jnp.float32,
    )

    @pl.when(k == pl.num_programs(2) - 1)
    def _():
        y = acc_ref[...] + b_ref[...].astype(jnp.float32)
        if apply_relu:
            y = jnp.maximum(y, 0.0)
        o_ref[...] = y.astype(o_ref.dtype)


def _round_up(x, m):
    return ((x + m - 1) // m) * m


def _pick_tile(dim, preferred, align):
    # Largest useful tile: the preferred size, or the whole (aligned) dim if smaller.
    return preferred if dim >= preferred else _round_up(dim, align)


def fc_forward(x, weight, bias, nl="relu", *, compute_dtype=jnp.bfloat16,
               tm_pref=128, tn_pref=256, tk_pref=512):
    """Pallas equivalent of FC.forward: relu(x @ W.T + b) (or no nonlinearity)."""
    if nl == "prelu":
        # TODO(synk): PReLU has a learnable slope parameter; not implemented here.
        raise NotImplementedError("NL='prelu' is not supported by this kernel")
    assert nl in ("relu", None, "none"), f"unsupported NL: {nl}"
    apply_relu = nl == "relu"

    B, IN = x.shape
    OUT, IN_w = weight.shape
    assert IN == IN_w
    out_dtype = x.dtype

    # bf16 operands halve weight HBM traffic (layer is weight-bandwidth bound at
    # small batch) and hit native bf16 MXU rate; accumulation stays f32.
    # NOTE: in a real model, pre-cast the weights once at parameter-prep time.
    if compute_dtype is not None:
        x = x.astype(compute_dtype)
        weight = weight.astype(compute_dtype)

    # Lane-dense tiles: sublane dims multiple of 8, lane dims multiple of 128.
    tm = _pick_tile(B, tm_pref, 8)
    tn = _pick_tile(OUT, tn_pref, 128)
    tk = _pick_tile(IN, tk_pref, 128)

    Mp, Np, Kp = _round_up(B, tm), _round_up(OUT, tn), _round_up(IN, tk)

    if (Mp, Kp) != (B, IN):
        x = jnp.pad(x, ((0, Mp - B), (0, Kp - IN)))
    if (Np, Kp) != (OUT, IN):
        weight = jnp.pad(weight, ((0, Np - OUT), (0, Kp - IN)))
    b2d = bias.astype(jnp.float32).reshape(1, OUT)
    if Np != OUT:
        b2d = jnp.pad(b2d, ((0, 0), (0, Np - OUT)))

    grid = (Mp // tm, Np // tn, Kp // tk)
    kernel = functools.partial(_fc_kernel, apply_relu=apply_relu)

    cost = pl.CostEstimate(
        flops=2 * B * IN * OUT,
        transcendentals=0,
        bytes_accessed=(x.size * x.dtype.itemsize
                        + weight.size * weight.dtype.itemsize
                        + b2d.size * 4
                        + Mp * Np * out_dtype.itemsize),
    )

    out_padded = pl.pallas_call(
        kernel,
        out_shape=jax.ShapeDtypeStruct((Mp, Np), out_dtype),
        grid_spec=pltpu.PrefetchScalarGridSpec(
            num_scalar_prefetch=0,
            grid=grid,
            in_specs=[
                pl.BlockSpec((tm, tk), lambda i, j, k: (i, k)),   # x
                pl.BlockSpec((tn, tk), lambda i, j, k: (j, k)),   # W [out, in]
                pl.BlockSpec((1, tn), lambda i, j, k: (0, j)),    # bias
            ],
            out_specs=pl.BlockSpec((tm, tn), lambda i, j, k: (i, j)),
            scratch_shapes=[pltpu.VMEM((tm, tn), jnp.float32)],
        ),
        compiler_params=pltpu.CompilerParams(
            dimension_semantics=("parallel", "parallel", "arbitrary"),
            # Safe on all generations: raises v5e's 16 MiB scoped default,
            # stays well under v7x's 64 MiB physical VMEM.
            vmem_limit_bytes=48 * 1024 * 1024,
        ),
        cost_estimate=cost,
    )(x, weight, b2d)

    if (Mp, Np) != (B, OUT):
        out_padded = out_padded[:B, :OUT]
    return out_padded


if __name__ == "__main__":
    # Small shapes implied by nn.Linear(in_features, out_features); sized so the
    # grid actually exercises multi-tile OUT and multi-step K accumulation.
    batch, in_features, out_features = 16, 1024, 512

    key = jax.random.PRNGKey(0)
    kx, kw, kb = jax.random.split(key, 3)

    x = jax.random.normal(kx, (batch, in_features), dtype=jnp.float32)
    bound = 1.0 / (in_features ** 0.5)
    weight = jax.random.uniform(
        kw, (out_features, in_features), minval=-bound, maxval=bound, dtype=jnp.float32
    )
    bias = jax.random.uniform(
        kb, (out_features,), minval=-bound, maxval=bound, dtype=jnp.float32
    )

    out = fc_forward(x, weight, bias, nl="relu")
    jax.block_until_ready(out)

    # Reference with the same bf16 operand cast + f32 accumulation.
    ref = jnp.maximum(
        jnp.dot(x.astype(jnp.bfloat16), weight.astype(jnp.bfloat16).T,
                preferred_element_type=jnp.float32) + bias,
        0.0,
    )
    assert out.shape == (batch, out_features)
    assert jnp.allclose(out, ref, atol=1e-3, rtol=1e-3), float(jnp.max(jnp.abs(out - ref)))

    # Ragged (non tile-aligned) shapes exercise the zero-padding path, no NL.
    x2 = jax.random.normal(kx, (5, 100), dtype=jnp.float32)
    w2 = jax.random.uniform(kw, (30, 100), minval=-0.1, maxval=0.1, dtype=jnp.float32)
    b2 = jax.random.uniform(kb, (30,), minval=-0.1, maxval=0.1, dtype=jnp.float32)
    out2 = fc_forward(x2, w2, b2, nl=None)
    jax.block_until_ready(out2)
    ref2 = jnp.dot(x2.astype(jnp.bfloat16), w2.astype(jnp.bfloat16).T,
                   preferred_element_type=jnp.float32) + b2
    assert out2.shape == (5, 30)
    assert jnp.allclose(out2, ref2, atol=1e-3, rtol=1e-3)

    print("KERNEL_OK")
</pallas_src>

<mosaic_0001>
module attributes {stable_mosaic.version = 11 : i64} {
  func.func @_fc_kernel(%arg0: i32, %arg1: i32, %arg2: i32, %arg3: memref<16x512xbf16, #tpu.memory_space<vmem>>, %arg4: memref<256x512xbf16, #tpu.memory_space<vmem>>, %arg5: memref<1x256xf32, #tpu.memory_space<vmem>>, %arg6: memref<16x256xf32, #tpu.memory_space<vmem>>, %arg7: memref<16x256xf32, #tpu.memory_space<vmem>>) attributes {dimension_semantics = [#tpu.dimension_semantics<parallel>, #tpu.dimension_semantics<parallel>, #tpu.dimension_semantics<arbitrary>], iteration_bounds = array<i64: 1, 2, 2>, scalar_prefetch = 0 : i64, scratch_operands = 1 : i64, tpu.core_type = #tpu.core_type<tc>, window_params = [{transform_indices = @transform_0, window_bounds = array<i64: 16, 512>}, {transform_indices = @transform_1, window_bounds = array<i64: 256, 512>}, {transform_indices = @transform_2, window_bounds = array<i64: 1, 256>}, {transform_indices = @transform_3, window_bounds = array<i64: 16, 256>}]} {
    %c0_i32 = arith.constant 0 : i32
    %0 = arith.cmpi eq, %arg2, %c0_i32 : i32
    %1 = arith.extui %0 : i1 to i32
    %c0_i32_0 = arith.constant 0 : i32
    %2 = arith.cmpi ne, %1, %c0_i32_0 : i32
    scf.if %2 {
      %cst_9 = arith.constant 0.000000e+00 : f32
      %12 = vector.broadcast %cst_9 : f32 to vector<16x256xf32>
      %c0_10 = arith.constant 0 : index
      %c0_11 = arith.constant 0 : index
      %13 = vector.load %arg7[%c0_10, %c0_11] : memref<16x256xf32, #tpu.memory_space<vmem>>, vector<16x256xf32>
      tpu.vector_store %arg7[%c0_10, %c0_11], %12 {strides = array<i32>} : memref<16x256xf32, #tpu.memory_space<vmem>>, vector<16x256xf32>,
    } else {
    }
    %c0 = arith.constant 0 : index
    %c0_1 = arith.constant 0 : index
    %3 = vector.load %arg7[%c0, %c0_1] : memref<16x256xf32, #tpu.memory_space<vmem>>, vector<16x256xf32>
    %c0_2 = arith.constant 0 : index
    %c0_3 = arith.constant 0 : index
    %4 = vector.load %arg3[%c0_2, %c0_3] : memref<16x512xbf16, #tpu.memory_space<vmem>>, vector<16x512xbf16>
    %c0_4 = arith.constant 0 : index
    %c0_5 = arith.constant 0 : index
    %5 = vector.load %arg4[%c0_4, %c0_5] : memref<256x512xbf16, #tpu.memory_space<vmem>>, vector<256x512xbf16>
    %cst = arith.constant dense<0.000000e+00> : vector<16x256xf32>
    %6 = tpu.matmul %4, %5, %cst {dimension_numbers = #tpu.dot_dimension_numbers<[1], [1], [0], [0], [0, 0, 1, 0], [], []>} : vector<16x512xbf16>, vector<256x512xbf16>, vector<16x256xf32> -> vector<16x256xf32>
    %7 = arith.addf %3, %6 : vector<16x256xf32>
    %c0_6 = arith.constant 0 : index
    %c0_7 = arith.constant 0 : index
    %8 = vector.load %arg7[%c0_6, %c0_7] : memref<16x256xf32, #tpu.memory_space<vmem>>, vector<16x256xf32>
    tpu.vector_store %arg7[%c0_6, %c0_7], %7 {strides = array<i32>} : memref<16x256xf32, #tpu.memory_space<vmem>>, vector<16x256xf32>,
    %c1_i32 = arith.constant 1 : i32
    %9 = arith.cmpi eq, %arg2, %c1_i32 : i32
    %10 = arith.extui %9 : i1 to i32
    %c0_i32_8 = arith.constant 0 : i32
    %11 = arith.cmpi ne, %10, %c0_i32_8 : i32
    scf.if %11 {
      %c0_9 = arith.constant 0 : index
      %c0_10 = arith.constant 0 : index
      %12 = vector.load %arg7[%c0_9, %c0_10] : memref<16x256xf32, #tpu.memory_space<vmem>>, vector<16x256xf32>
      %c0_11 = arith.constant 0 : index
      %c0_12 = arith.constant 0 : index
      %13 = vector.load %arg5[%c0_11, %c0_12] : memref<1x256xf32, #tpu.memory_space<vmem>>, vector<1x256xf32>
      %14 = vector.broadcast %13 : vector<1x256xf32> to vector<16x256xf32>
      %15 = arith.addf %12, %14 : vector<16x256xf32>
      %cst_13 = arith.constant 0.000000e+00 : f32
      %16 = vector.broadcast %cst_13 : f32 to vector<16x256xf32>
      %17 = arith.maximumf %15, %16 : vector<16x256xf32>
      %c0_14 = arith.constant 0 : index
      %c0_15 = arith.constant 0 : index
      %18 = vector.load %arg6[%c0_14, %c0_15] : memref<16x256xf32, #tpu.memory_space<vmem>>, vector<16x256xf32>
      tpu.vector_store %arg6[%c0_14, %c0_15], %17 {strides = array<i32>} : memref<16x256xf32, #tpu.memory_space<vmem>>, vector<16x256xf32>,
    } else {
    }
    return
  }
  func.func @transform_0(%arg0: i32, %arg1: i32, %arg2: i32) -> (i32, i32) {
    %c0_i32 = arith.constant 0 : i32
    return %arg0, %arg2 : i32, i32
  }
  func.func @transform_1(%arg0: i32, %arg1: i32, %arg2: i32) -> (i32, i32) {
    %c0_i32 = arith.constant 0 : i32
    return %arg1, %arg2 : i32, i32
  }
  func.func @transform_2(%arg0: i32, %arg1: i32, %arg2: i32) -> (i32, i32) {
    %c0_i32 = arith.constant 0 : i32
    %c0_i32_0 = arith.constant 0 : i32
    return %c0_i32, %arg1 : i32, i32
  }
  func.func @transform_3(%arg0: i32, %arg1: i32, %arg2: i32) -> (i32, i32) {
    %c0_i32 = arith.constant 0 : i32
    return %arg0, %arg1 : i32, i32
  }
}

</mosaic_0001>

<llo_original>
// kernel: tpu_custom_call.1
$region0: #{tpu_custom_call.1}
  #allocation0 [shape = 'u32[]', space=smem, size = 0x4, offset = 0x4, fixed_abs, tag = 'smem constant byte address 0x4 - core index']
  #allocation1 [shape = 'u32[144,128]{1,0:T(1,128)}', space=vmem, size = 0x12000, scoped, tag = 'internal scratch']
  #allocation2 [shape = 'f32[16,256]{1,0:T(8,128)}', space=vmem, size = 0x4000, scoped, tag = 'scratch operand']
  %s0 = inlined_call_operand.hbm [shape: bf16[16,1024], index: 0, kind: input, shape index: {}]
  %s1 = inlined_call_operand.hbm [shape: bf16[512,1024], index: 1, kind: input, shape index: {}]
  %s2 = inlined_call_operand.hbm [shape: f32[1,512], index: 2, kind: input, shape index: {}]
  %s3 = inlined_call_operand.hbm [shape: f32[16,512], index: 3, kind: output, shape index: {}]
  %s4 = sld [smem:[#allocation0]]
  $region65: #{tpu_custom_call.1} parent=0
    _
  %s6 = ssub.s32 1, %s4
  %s7 = scalar_select 0, %s6, %s4
  $region1: #{tpu_custom_call.1} parent=0
    #allocation3 [shape = 'u8[32768]{0}', space=vmem, size = 0x8000, scoped, tag = 'input window, operand 0']
    #allocation4 [shape = 's32[2]{0}', space=sflag, size = 0x8, scoped, tag = 'scoped memory for tpu_custom_call.1']
    #allocation5 [shape = 's32[2]{0}', space=sflag, size = 0x8, scoped, tag = 'scoped memory for tpu_custom_call.1']
    #allocation6 [shape = 'u8[524288]{0}', space=vmem, size = 0x80000, scoped, tag = 'input window, operand 1']
    #allocation7 [shape = 's32[2]{0}', space=sflag, size = 0x8, scoped, tag = 'scoped memory for tpu_custom_call.1']
    #allocation8 [shape = 'u8[2048]{0}', space=vmem, size = 0x800, scoped, tag = 'input window, operand 2']
    #allocation9 [shape = 'u8[32768]{0}', space=vmem, size = 0x8000, scoped, tag = 'output window, operand 0']
    %8 = vsyncpa [#allocation4], 0
    %s9 = scalar_lea.sflag [#allocation4], 1
    %10 = vsyncpa %s9, 0
    %11 = vsyncpa [#allocation7], 0
    %s12 = scalar_lea.sflag [#allocation7], 1
    %13 = vsyncpa %s12, 0
    %14 = vsyncpa [#allocation5], 0
    %s15 = scalar_lea.sflag [#allocation5], 1
    %16 = vsyncpa %s15, 0
    loop: start=0, step=1, limit=6
    $region2: #{tpu_custom_call.1} parent=1 // loop_pre_header
      _
    $region3: #{tpu_custom_call.1} parent=1 // loop_header
      %s18 = sphi 0, %s22
      %p19 = scmp.ge.s32.totalorder %s18, 6
      %s25 = sphi 0, %s44
      %s26 = sphi 0, %s40
      %s27 = sphi 0, %s36
      %s28 = sphi 0, %s25
      %s29 = sphi 0, %s26
      %s30 = sphi 0, %s27
      %s31 = sphi 0, %s28
      %s32 = sphi 0, %s29
      %s33 = sphi 0, %s30
      %s49 = sphi 0, %s51
      %s52 = sphi 0, %s49
      %s53 = sphi 0, %s52
      %s69 = sphi 0, %s53
      %s77 = sphi 0, %s79
      %s80 = sphi 0, %s77
      %s81 = sphi 0, %s80
      %s97 = sphi 0, %s81
      %s103 = sphi 0, %s105
      %s106 = sphi 0, %s103
      %s107 = sphi 0, %s106
      %s123 = sphi 0, %s107
      %s131 = sphi 0, %s133
      %s134 = sphi 0, %s131
      %s135 = sphi 0, %s134
      %s151 = sphi 0, %s135
    $region4: #{tpu_custom_call.1} parent=1 // loop_header_branch
      %21 = sbr.rel (%p19) target = $region8
    $region5: #{tpu_custom_call.1} parent=1 // loop_body
      %s23 = ssub.s32 %s18, 1
      %s24 = ssub.s32 %s18, 2
      %s34 = sadd.s32 1, %s27
      %p35 = scmp.ge.s32.totalorder %s34, 2
      %s36 = scalar_select %p35, 0, %s34
      %s37 = sadd.s32 1, %s26
      %s38 = scalar_select %p35, %s37, %s26
      %p39 = scmp.ge.s32.totalorder %s38, 2
      %s40 = scalar_select %p39, 0, %s38
      %s41 = sadd.s32 1, %s25
      %s42 = scalar_select %p39, %s41, %s25
      %p43 = scmp.ge.s32.totalorder %s42, 1
      %s44 = scalar_select %p43, 0, %s42
      %s45 = ssub.s32 %s25, %s44
      %s46 = ssub.s32 %s27, %s36
      %s47 = sor.u32 %s45, %s46
      %p48 = scmp.eq.s32.totalorder %s47, 0
      %s50 = sadd.s32 %s49, 1
      %s51 = scalar_select %p48, %s49, %s50
      %p54 = pneg %p48
      %p55 = scmp.eq.s32.totalorder %s18, 3
      %p56 = por %p54, %p55
      %p57 = scmp.ne.s32.totalorder %s49, %s52
      %p58 = scmp.eq.s32.totalorder %s18, 0
      %p59 = por %p57, %p58
      %p60 = scmp.ne.s32.totalorder %s49, %s52
      %p61 = scmp.eq.s32.totalorder %s23, 3
      %p62 = por %p60, %p61
      %p63 = scmp.ne.s32.totalorder %s52, %s53
      %p64 = scmp.eq.s32.totalorder %s23, 0
      %p65 = por %p63, %p64
      %p66 = scmp.ne.s32.totalorder %s52, %s53
      %p67 = scmp.eq.s32.totalorder %s24, 3
      %p68 = por %p66, %p67
      %p70 = scmp.ne.s32.totalorder %s53, %s69
      %p71 = scmp.eq.s32.totalorder %s24, 0
      %p72 = por %p70, %p71
      %s73 = ssub.s32 %s26, %s40
      %s74 = ssub.s32 %s27, %s36
      %s75 = sor.u32 %s73, %s74
      %p76 = scmp.eq.s32.totalorder %s75, 0
      %s78 = sadd.s32 %s77, 1
      %s79 = scalar_select %p76, %s77, %s78
      %p82 = pneg %p76
      %p83 = scmp.eq.s32.totalorder %s18, 3
      %p84 = por %p82, %p83
      %p85 = scmp.ne.s32.totalorder %s77, %s80
      %p86 = scmp.eq.s32.totalorder %s18, 0
      %p87 = por %p85, %p86
      %p88 = scmp.ne.s32.totalorder %s77, %s80
      %p89 = scmp.eq.s32.totalorder %s23, 3
      %p90 = por %p88, %p89
      %p91 = scmp.ne.s32.totalorder %s80, %s81
      %p92 = scmp.eq.s32.totalorder %s23, 0
      %p93 = por %p91, %p92
      %p94 = scmp.ne.s32.totalorder %s80, %s81
      %p95 = scmp.eq.s32.totalorder %s24, 3
      %p96 = por %p94, %p95
      %p98 = scmp.ne.s32.totalorder %s81, %s97
      %p99 = scmp.eq.s32.totalorder %s24, 0
      %p100 = por %p98, %p99
      %s101 = ssub.s32 %s26, %s40
      %p102 = scmp.eq.s32.totalorder %s101, 0
      %s104 = sadd.s32 %s103, 1
      %s105 = scalar_select %p102, %s103, %s104
      %p108 = pneg %p102
      %p109 = scmp.eq.s32.totalorder %s18, 3
      %p110 = por %p108, %p109
      %p111 = scmp.ne.s32.totalorder %s103, %s106
      %p112 = scmp.eq.s32.totalorder %s18, 0
      %p113 = por %p111, %p112
      %p114 = scmp.ne.s32.totalorder %s103, %s106
      %p115 = scmp.eq.s32.totalorder %s23, 3
      %p116 = por %p114, %p115
      %p117 = scmp.ne.s32.totalorder %s106, %s107
      %p118 = scmp.eq.s32.totalorder %s23, 0
      %p119 = por %p117, %p118
      %p120 = scmp.ne.s32.totalorder %s106, %s107
      %p121 = scmp.eq.s32.totalorder %s24, 3
      %p122 = por %p120, %p121
      %p124 = scmp.ne.s32.totalorder %s107, %s123
      %p125 = scmp.eq.s32.totalorder %s24, 0
      %p126 = por %p124, %p125
      %s127 = ssub.s32 %s25, %s44
      %s128 = ssub.s32 %s26, %s40
      %s129 = sor.u32 %s127, %s128
      %p130 = scmp.eq.s32.totalorder %s129, 0
      %s132 = sadd.s32 %s131, 1
      %s133 = scalar_select %p130, %s131, %s132
      %p136 = pneg %p130
      %p137 = scmp.eq.s32.totalorder %s18, 3
      %p138 = por %p136, %p137
      %p139 = scmp.ne.s32.totalorder %s131, %s134
      %p140 = scmp.eq.s32.totalorder %s18, 0
      %p141 = por %p139, %p140
      %p142 = scmp.ne.s32.totalorder %s131, %s134
      %p143 = scmp.eq.s32.totalorder %s23, 3
      %p144 = por %p142, %p143
      %p145 = scmp.ne.s32.totalorder %s134, %s135
      %p146 = scmp.eq.s32.totalorder %s23, 0
      %p147 = por %p145, %p146
      %p148 = scmp.ne.s32.totalorder %s134, %s135
      %p149 = scmp.eq.s32.totalorder %s24, 3
      %p150 = por %p148, %p149
      %p152 = scmp.ne.s32.totalorder %s135, %s151
      %p153 = scmp.eq.s32.totalorder %s24, 0
      %p154 = por %p152, %p153
      %p155 = scmp.le.s32.totalorder 1, %s18
      %p156 = scmp.lt.s32.totalorder %s18, 5
      %p157 = pnand %p155, %p156
      %p158 = pneg %p157
      // Predicated region
      $region9: #{tpu_custom_call.1} parent=5 // pred_check
        _
      $region10: #{tpu_custom_call.1} parent=5 // pred_check_branch
        %160 = sbr.rel (%p157) target = $region12
      $region11: #{tpu_custom_call.1} parent=5 // pred_region
        %s161 = ssub.s32 %s18, 1
      $region12: #{tpu_custom_call.1} parent=5 // pred_fallthru
        _
      %p162 = scmp.lt.s32.totalorder %s18, 4
      // Predicated region
      $region13: #{tpu_custom_call.1} parent=5 // pred_check
        %p163 = pneg %p162
      $region14: #{tpu_custom_call.1} parent=5 // pred_check_branch
        %165 = sbr.rel (%p163) target = $region16
      $region15: #{tpu_custom_call.1} parent=5 // pred_region
        // Predicated region
        $region17: #{tpu_custom_call.1} parent=15 // pred_check
          %p166 = pneg %p59
        $region18: #{tpu_custom_call.1} parent=15 // pred_check_branch
          %168 = sbr.rel (%p166) target = $region20
        $region19: #{tpu_custom_call.1} parent=15 // pred_region
          %s169 = sand.u32 %s49, 1
          %s170 = scalar_lea.sflag [#allocation4], %s169
          %s171 = sand.u32 %s49, 1
          %s172 = smul.addr %s171, 32
          %s173 = scalar_lea.vmem [#allocation3], %s172
          %s174 = smul.u32 2, %s25
          %s175 = smul.u32 4, %s27
          %s177 = ssub.s32 512, 512
          %178 = vsyncadd %s170, %s177
          %s179 = smul.addr %s174, 8
          %s180 = sadd.s32 %s175, %s179
          %s181 = smul.addr %s180, 64
          %s182 = scalar_lea.hbm %s0, %s181
          %s183 = sshll.u32 %s173, 4
          %s184 = int_to_ptr.vmem [resolvable:$true] %s183
          %189 = dma.hbm_to_vmem [thread:$0]  %s182, 512, %s184, %s170, 512, 256, 16
        $region20: #{tpu_custom_call.1} parent=15 // pred_fallthru
          _
        // Predicated region
        $region21: #{tpu_custom_call.1} parent=15 // pred_check
          %p190 = pneg %p87
        $region22: #{tpu_custom_call.1} parent=15 // pred_check_branch
          %192 = sbr.rel (%p190) target = $region24
        $region23: #{tpu_custom_call.1} parent=15 // pred_region
          %s193 = sand.u32 %s18, 1
          %s194 = scalar_lea.sflag [#allocation7], %s193
          %s195 = sand.u32 %s77, 1
          %s196 = smul.addr %s195, 512
          %s197 = scalar_lea.vmem [#allocation6], %s196
          %s198 = smul.u32 32, %s26
          %s199 = smul.u32 4, %s27
          %s201 = ssub.s32 8192, 8192
          %202 = vsyncadd %s194, %s201
          %s203 = smul.addr %s198, 8
          %s204 = sadd.s32 %s199, %s203
          %s205 = smul.addr %s204, 64
          %s206 = scalar_lea.hbm %s1, %s205
          %s207 = sshll.u32 %s197, 4
          %s208 = int_to_ptr.vmem [resolvable:$true] %s207
          %213 = dma.hbm_to_vmem [thread:$0]  %s206, 8192, %s208, %s194, 512, 256, 16
        $region24: #{tpu_custom_call.1} parent=15 // pred_fallthru
          _
        // Predicated region
        $region25: #{tpu_custom_call.1} parent=15 // pred_check
          %p214 = pneg %p113
        $region26: #{tpu_custom_call.1} parent=15 // pred_check_branch
          %216 = sbr.rel (%p214) target = $region28
        $region27: #{tpu_custom_call.1} parent=15 // pred_region
          %s217 = sand.u32 %s18, 1
          %s218 = scalar_lea.sflag [#allocation7], %s217
          %s219 = sand.u32 %s103, 1
          %s220 = smul.addr %s219, 2
          %s221 = scalar_lea.vmem [#allocation8], %s220
          %s222 = smul.u32 2, %s26
          %s224 = ssub.s32 32, 32
          %225 = vsyncadd %s218, %s224
          %s226 = smul.addr %s222, 16
          %s227 = scalar_lea.hbm %s2, %s226
          %s229 = sshll.u32 %s221, 4
          %s230 = int_to_ptr.vmem [resolvable:$true] %s229
          %232 = dma.hbm_to_vmem [thread:$0]  %s227, 32, %s230, %s218
        $region28: #{tpu_custom_call.1} parent=15 // pred_fallthru
          _
      $region16: #{tpu_custom_call.1} parent=5 // pred_fallthru
        _
      %p233 = scmp.le.s32.totalorder 1, %s18
      %p234 = scmp.lt.s32.totalorder %s18, 5
      %p235 = pnand %p233, %p234
      %p236 = pneg %p235
      // Predicated region
      $region29: #{tpu_custom_call.1} parent=5 // pred_check
        _
      $region30: #{tpu_custom_call.1} parent=5 // pred_check_branch
        %238 = sbr.rel (%p235) target = $region32
      $region31: #{tpu_custom_call.1} parent=5 // pred_region
        %s239 = ssub.s32 %s18, 1
        %s240 = sand.u32 %s52, 1
        %s241 = scalar_lea.sflag [#allocation4], %s240
        %s242 = sand.u32 %s52, 1
        %s243 = smul.addr %s242, 32
        %s244 = scalar_lea.vmem [#allocation3], %s243
        // Predicated region
        $region33: #{tpu_custom_call.1} parent=31 // pred_check
          %p245 = pneg %p65
        $region34: #{tpu_custom_call.1} parent=31 // pred_check_branch
          %247 = sbr.rel (%p245) target = $region36
        $region35: #{tpu_custom_call.1} parent=31 // pred_region
          %248 = dma.done %s241, 512
        $region36: #{tpu_custom_call.1} parent=31 // pred_fallthru
          _
        %s249 = sand.u32 %s23, 1
        %s250 = scalar_lea.sflag [#allocation7], %s249
        %s251 = sand.u32 %s80, 1
        %s252 = smul.addr %s251, 512
        %s253 = scalar_lea.vmem [#allocation6], %s252
        // Predicated region
        $region37: #{tpu_custom_call.1} parent=31 // pred_check
          %p254 = pneg %p93
        $region38: #{tpu_custom_call.1} parent=31 // pred_check_branch
          %256 = sbr.rel (%p254) target = $region40
        $region39: #{tpu_custom_call.1} parent=31 // pred_region
          %257 = dma.done %s250, 8192
        $region40: #{tpu_custom_call.1} parent=31 // pred_fallthru
          _
        %s258 = sand.u32 %s23, 1
        %s259 = scalar_lea.sflag [#allocation7], %s258
        %s260 = sand.u32 %s106, 1
        %s261 = smul.addr %s260, 2
        %s262 = scalar_lea.vmem [#allocation8], %s261
        // Predicated region
        $region41: #{tpu_custom_call.1} parent=31 // pred_check
          %p263 = pneg %p119
        $region42: #{tpu_custom_call.1} parent=31 // pred_check_branch
          %265 = sbr.rel (%p263) target = $region44
        $region43: #{tpu_custom_call.1} parent=31 // pred_region
          %266 = dma.done %s259, 32
        $region44: #{tpu_custom_call.1} parent=31 // pred_fallthru
          _
        %s267 = sand.u32 %s52, 1
        %s268 = scalar_lea.sflag [#allocation4], %s267
        %s269 = sand.u32 %s52, 1
        %s270 = smul.addr %s269, 32
        %s271 = scalar_lea.vmem [#allocation3], %s270
        %p272 = pneg %p65
        %p273 = pneg %p62
        %s274 = sand.u32 %s23, 1
        %s275 = scalar_lea.sflag [#allocation7], %s274
        %s276 = sand.u32 %s80, 1
        %s277 = smul.addr %s276, 512
        %s278 = scalar_lea.vmem [#allocation6], %s277
        %p279 = pneg %p93
        %p280 = pneg %p90
        %s281 = sand.u32 %s23, 1
        %s282 = scalar_lea.sflag [#allocation7], %s281
        %s283 = sand.u32 %s106, 1
        %s284 = smul.addr %s283, 2
        %s285 = scalar_lea.vmem [#allocation8], %s284
        %p286 = pneg %p119
        %p287 = pneg %p116
        %p288 = pneg %p147
        %p289 = pneg %p144
        %s290 = sand.u32 %s134, 1
        %s291 = scalar_lea.sflag [#allocation5], %s290
        %s292 = sand.u32 %s134, 1
        %s293 = smul.addr %s292, 32
        %s294 = scalar_lea.vmem [#allocation9], %s293
        %s295 = smul.u32 2, %s28
        %s296 = smul.u32 4, %s30
        %s297 = smul.u32 32, %s29
        %s298 = smul.u32 4, %s30
        %s299 = smul.u32 2, %s29
        %s300 = smul.u32 2, %s28
        %s301 = smul.u32 2, %s29
        %p302 = scmp.eq.s32.totalorder %s30, 0
        // Predicated region
        $region45: #{tpu_custom_call.1} parent=31 // pred_check
          %p303 = pneg %p302
        $region46: #{tpu_custom_call.1} parent=31 // pred_check_branch
          %305 = sbr.rel (%p303) target = $region48
        $region47: #{tpu_custom_call.1} parent=31 // pred_region
          %306 = vst [vmem:[#allocation2] sm:$0xff] 0.0
          %307 = vst [vmem:[#allocation2 + $0x8] sm:$0xff] 0.0
          %308 = vst [vmem:[#allocation2 + $0x10] sm:$0xff] 0.0
          %309 = vst [vmem:[#allocation2 + $0x18] sm:$0xff] 0.0
        $region48: #{tpu_custom_call.1} parent=31 // pred_fallthru
          _
        %v310 = vld [vmem:[#allocation2] sm:$0xff]
        %v311 = vld [vmem:[#allocation2 + $0x8] sm:$0xff]
        %v312 = vld [vmem:[#allocation2 + $0x10] sm:$0xff]
        %v313 = vld [vmem:[#allocation2 + $0x18] sm:$0xff]
        %v314 = vld [vmem:[%s244] sm:$0xff]
        %v315 = vld [vmem:[%s244 + $0x8] sm:$0xff]
        %v316 = vld [vmem:[%s244 + $0x10] sm:$0xff]
        %v317 = vld [vmem:[%s244 + $0x18] sm:$0xff]
        %v318 = vld [vmem:[%s253] sm:$0xff]
        %v319 = vld [vmem:[%s253 + $0x8] sm:$0xff]
        %v320 = vld [vmem:[%s253 + $0x10] sm:$0xff]
        %v321 = vld [vmem:[%s253 + $0x18] sm:$0xff]
        %v322 = vld [vmem:[%s253 + $0x20] sm:$0xff]
        %v323 = vld [vmem:[%s253 + $0x28] sm:$0xff]
        %v324 = vld [vmem:[%s253 + $0x30] sm:$0xff]
        %v325 = vld [vmem:[%s253 + $0x38] sm:$0xff]
        %v326 = vld [vmem:[%s253 + $0x40] sm:$0xff]
        %v327 = vld [vmem:[%s253 + $0x48] sm:$0xff]
        %v328 = vld [vmem:[%s253 + $0x50] sm:$0xff]
        %v329 = vld [vmem:[%s253 + $0x58] sm:$0xff]
        %v330 = vld [vmem:[%s253 + $0x60] sm:$0xff]
        %v331 = vld [vmem:[%s253 + $0x68] sm:$0xff]
        %v332 = vld [vmem:[%s253 + $0x70] sm:$0xff]
        %v333 = vld [vmem:[%s253 + $0x78] sm:$0xff]
        %v334 = vld [vmem:[%s253 + $0x80] sm:$0xff]
        %v335 = vld [vmem:[%s253 + $0x88] sm:$0xff]
        %v336 = vld [vmem:[%s253 + $0x90] sm:$0xff]
        %v337 = vld [vmem:[%s253 + $0x98] sm:$0xff]
        %v338 = vld [vmem:[%s253 + $0xa0] sm:$0xff]
        %v339 = vld [vmem:[%s253 + $0xa8] sm:$0xff]
        %v340 = vld [vmem:[%s253 + $0xb0] sm:$0xff]
        %v341 = vld [vmem:[%s253 + $0xb8] sm:$0xff]
        %v342 = vld [vmem:[%s253 + $0xc0] sm:$0xff]
        %v343 = vld [vmem:[%s253 + $0xc8] sm:$0xff]
        %v344 = vld [vmem:[%s253 + $0xd0] sm:$0xff]
        %v345 = vld [vmem:[%s253 + $0xd8] sm:$0xff]
        %v346 = vld [vmem:[%s253 + $0xe0] sm:$0xff]
        %v347 = vld [vmem:[%s253 + $0xe8] sm:$0xff]
        %v348 = vld [vmem:[%s253 + $0xf0] sm:$0xff]
        %v349 = vld [vmem:[%s253 + $0xf8] sm:$0xff]
        %v350 = vld [vmem:[%s253 + $0x100] sm:$0xff]
        %v351 = vld [vmem:[%s253 + $0x108] sm:$0xff]
        %v352 = vld [vmem:[%s253 + $0x110] sm:$0xff]
        %v353 = vld [vmem:[%s253 + $0x118] sm:$0xff]
        %v354 = vld [vmem:[%s253 + $0x120] sm:$0xff]
        %v355 = vld [vmem:[%s253 + $0x128] sm:$0xff]
        %v356 = vld [vmem:[%s253 + $0x130] sm:$0xff]
        %v357 = vld [vmem:[%s253 + $0x138] sm:$0xff]
        %v358 = vld [vmem:[%s253 + $0x140] sm:$0xff]
        %v359 = vld [vmem:[%s253 + $0x148] sm:$0xff]
        %v360 = vld [vmem:[%s253 + $0x150] sm:$0xff]
        %v361 = vld [vmem:[%s253 + $0x158] sm:$0xff]
        %v362 = vld [vmem:[%s253 + $0x160] sm:$0xff]
        %v363 = vld [vmem:[%s253 + $0x168] sm:$0xff]
        %v364 = vld [vmem:[%s253 + $0x170] sm:$0xff]
        %v365 = vld [vmem:[%s253 + $0x178] sm:$0xff]
        %v366 = vld [vmem:[%s253 + $0x180] sm:$0xff]
        %v367 = vld [vmem:[%s253 + $0x188] sm:$0xff]
        %v368 = vld [vmem:[%s253 + $0x190] sm:$0xff]
        %v369 = vld [vmem:[%s253 + $0x198] sm:$0xff]
        %v370 = vld [vmem:[%s253 + $0x1a0] sm:$0xff]
        %v371 = vld [vmem:[%s253 + $0x1a8] sm:$0xff]
        %v372 = vld [vmem:[%s253 + $0x1b0] sm:$0xff]
        %v373 = vld [vmem:[%s253 + $0x1b8] sm:$0xff]
        %v374 = vld [vmem:[%s253 + $0x1c0] sm:$0xff]
        %v375 = vld [vmem:[%s253 + $0x1c8] sm:$0xff]
        %v376 = vld [vmem:[%s253 + $0x1d0] sm:$0xff]
        %v377 = vld [vmem:[%s253 + $0x1d8] sm:$0xff]
        %v378 = vld [vmem:[%s253 + $0x1e0] sm:$0xff]
        %v379 = vld [vmem:[%s253 + $0x1e8] sm:$0xff]
        %v380 = vld [vmem:[%s253 + $0x1f0] sm:$0xff]
        %v381 = vld [vmem:[%s253 + $0x1f8] sm:$0xff]
        %v386 = vunpack.c.l.b16 %v314
        %v387 = vunpack.c.h.b16 %v314
        %v388 = vunpack.c.l.b16 %v315
        %v389 = vunpack.c.h.b16 %v315
        %v390 = vunpack.c.l.b16 %v316
        %v391 = vunpack.c.h.b16 %v316
        %v392 = vunpack.c.l.b16 %v317
        %v393 = vunpack.c.h.b16 %v317
        %v394 = vpack.c.b16 %v390, %v386
        %v395 = vpack.c.b16 %v391, %v387
        %v396 = vpack.c.b16 %v392, %v388
        %v397 = vpack.c.b16 %v393, %v389
        %v466 = vunpack.c.l.b16 %v318
        %v467 = vunpack.c.h.b16 %v318
        %v468 = vunpack.c.l.b16 %v319
        %v469 = vunpack.c.h.b16 %v319
        %v470 = vunpack.c.l.b16 %v320
        %v471 = vunpack.c.h.b16 %v320
        %v472 = vunpack.c.l.b16 %v321
        %v473 = vunpack.c.h.b16 %v321
        %v474 = vunpack.c.l.b16 %v322
        %v475 = vunpack.c.h.b16 %v322
        %v476 = vunpack.c.l.b16 %v323
        %v477 = vunpack.c.h.b16 %v323
        %v478 = vunpack.c.l.b16 %v324
        %v479 = vunpack.c.h.b16 %v324
        %v480 = vunpack.c.l.b16 %v325
        %v481 = vunpack.c.h.b16 %v325
        %v482 = vunpack.c.l.b16 %v326
        %v483 = vunpack.c.h.b16 %v326
        %v484 = vunpack.c.l.b16 %v327
        %v485 = vunpack.c.h.b16 %v327
        %v486 = vunpack.c.l.b16 %v328
        %v487 = vunpack.c.h.b16 %v328
        %v488 = vunpack.c.l.b16 %v329
        %v489 = vunpack.c.h.b16 %v329
        %v490 = vunpack.c.l.b16 %v330
        %v491 = vunpack.c.h.b16 %v330
        %v492 = vunpack.c.l.b16 %v331
        %v493 = vunpack.c.h.b16 %v331
        %v494 = vunpack.c.l.b16 %v332
        %v495 = vunpack.c.h.b16 %v332
        %v496 = vunpack.c.l.b16 %v333
        %v497 = vunpack.c.h.b16 %v333
        %v498 = vunpack.c.l.b16 %v334
        %v499 = vunpack.c.h.b16 %v334
        %v500 = vunpack.c.l.b16 %v335
        %v501 = vunpack.c.h.b16 %v335
        %v502 = vunpack.c.l.b16 %v336
        %v503 = vunpack.c.h.b16 %v336
        %v504 = vunpack.c.l.b16 %v337
        %v505 = vunpack.c.h.b16 %v337
        %v506 = vunpack.c.l.b16 %v338
        %v507 = vunpack.c.h.b16 %v338
        %v508 = vunpack.c.l.b16 %v339
        %v509 = vunpack.c.h.b16 %v339
        %v510 = vunpack.c.l.b16 %v340
        %v511 = vunpack.c.h.b16 %v340
        %v512 = vunpack.c.l.b16 %v341
        %v513 = vunpack.c.h.b16 %v341
        %v514 = vunpack.c.l.b16 %v342
        %v515 = vunpack.c.h.b16 %v342
        %v516 = vunpack.c.l.b16 %v343
        %v517 = vunpack.c.h.b16 %v343
        %v518 = vunpack.c.l.b16 %v344
        %v519 = vunpack.c.h.b16 %v344
        %v520 = vunpack.c.l.b16 %v345
        %v521 = vunpack.c.h.b16 %v345
        %v522 = vunpack.c.l.b16 %v346
        %v523 = vunpack.c.h.b16 %v346
        %v524 = vunpack.c.l.b16 %v347
        %v525 = vunpack.c.h.b16 %v347
        %v526 = vunpack.c.l.b16 %v348
        %v527 = vunpack.c.h.b16 %v348
        %v528 = vunpack.c.l.b16 %v349
        %v529 = vunpack.c.h.b16 %v349
        %v530 = vunpack.c.l.b16 %v350
        %v531 = vunpack.c.h.b16 %v350
        %v532 = vunpack.c.l.b16 %v351
        %v533 = vunpack.c.h.b16 %v351
        %v534 = vunpack.c.l.b16 %v352
        %v535 = vunpack.c.h.b16 %v352
        %v536 = vunpack.c.l.b16 %v353
        %v537 = vunpack.c.h.b16 %v353
        %v538 = vunpack.c.l.b16 %v354
        %v539 = vunpack.c.h.b16 %v354
        %v540 = vunpack.c.l.b16 %v355
        %v541 = vunpack.c.h.b16 %v355
        %v542 = vunpack.c.l.b16 %v356
        %v543 = vunpack.c.h.b16 %v356
        %v544 = vunpack.c.l.b16 %v357
        %v545 = vunpack.c.h.b16 %v357
        %v546 = vunpack.c.l.b16 %v358
        %v547 = vunpack.c.h.b16 %v358
        %v548 = vunpack.c.l.b16 %v359
        %v549 = vunpack.c.h.b16 %v359
        %v550 = vunpack.c.l.b16 %v360
        %v551 = vunpack.c.h.b16 %v360
        %v552 = vunpack.c.l.b16 %v361
        %v553 = vunpack.c.h.b16 %v361
        %v554 = vunpack.c.l.b16 %v362
        %v555 = vunpack.c.h.b16 %v362
        %v556 = vunpack.c.l.b16 %v363
        %v557 = vunpack.c.h.b16 %v363
        %v558 = vunpack.c.l.b16 %v364
        %v559 = vunpack.c.h.b16 %v364
        %v560 = vunpack.c.l.b16 %v365
        %v561 = vunpack.c.h.b16 %v365
        %v562 = vunpack.c.l.b16 %v366
        %v563 = vunpack.c.h.b16 %v366
        %v564 = vunpack.c.l.b16 %v367
        %v565 = vunpack.c.h.b16 %v367
        %v566 = vunpack.c.l.b16 %v368
        %v567 = vunpack.c.h.b16 %v368
        %v568 = vunpack.c.l.b16 %v369
        %v569 = vunpack.c.h.b16 %v369
        %v570 = vunpack.c.l.b16 %v370
        %v571 = vunpack.c.h.b16 %v370
        %v572 = vunpack.c.l.b16 %v371
        %v573 = vunpack.c.h.b16 %v371
        %v574 = vunpack.c.l.b16 %v372
        %v575 = vunpack.c.h.b16 %v372
        %v576 = vunpack.c.l.b16 %v373
        %v577 = vunpack.c.h.b16 %v373
        %v578 = vunpack.c.l.b16 %v374
        %v579 = vunpack.c.h.b16 %v374
        %v580 = vunpack.c.l.b16 %v375
        %v581 = vunpack.c.h.b16 %v375
        %v582 = vunpack.c.l.b16 %v376
        %v583 = vunpack.c.h.b16 %v376
        %v584 = vunpack.c.l.b16 %v377
        %v585 = vunpack.c.h.b16 %v377
        %v586 = vunpack.c.l.b16 %v378
        %v587 = vunpack.c.h.b16 %v378
        %v588 = vunpack.c.l.b16 %v379
        %v589 = vunpack.c.h.b16 %v379
        %v590 = vunpack.c.l.b16 %v380
        %v591 = vunpack.c.h.b16 %v380
        %v592 = vunpack.c.l.b16 %v381
        %v593 = vunpack.c.h.b16 %v381
        %v594 = vpack.c.b16 %v470, %v466
        %v595 = vpack.c.b16 %v471, %v467
        %v596 = vpack.c.b16 %v472, %v468
        %v597 = vpack.c.b16 %v473, %v469
        %v598 = vpack.c.b16 %v478, %v474
        %v599 = vpack.c.b16 %v479, %v475
        %v600 = vpack.c.b16 %v480, %v476
        %v601 = vpack.c.b16 %v481, %v477
        %v602 = vpack.c.b16 %v486, %v482
        %v603 = vpack.c.b16 %v487, %v483
        %v604 = vpack.c.b16 %v488, %v484
        %v605 = vpack.c.b16 %v489, %v485
        %v606 = vpack.c.b16 %v494, %v490
        %v607 = vpack.c.b16 %v495, %v491
        %v608 = vpack.c.b16 %v496, %v492
        %v609 = vpack.c.b16 %v497, %v493
        %v610 = vpack.c.b16 %v502, %v498
        %v611 = vpack.c.b16 %v503, %v499
        %v612 = vpack.c.b16 %v504, %v500
        %v613 = vpack.c.b16 %v505, %v501
        %v614 = vpack.c.b16 %v510, %v506
        %v615 = vpack.c.b16 %v511, %v507
        %v616 = vpack.c.b16 %v512, %v508
        %v617 = vpack.c.b16 %v513, %v509
        %v618 = vpack.c.b16 %v518, %v514
        %v619 = vpack.c.b16 %v519, %v515
        %v620 = vpack.c.b16 %v520, %v516
        %v621 = vpack.c.b16 %v521, %v517
        %v622 = vpack.c.b16 %v526, %v522
        %v623 = vpack.c.b16 %v527, %v523
        %v624 = vpack.c.b16 %v528, %v524
        %v625 = vpack.c.b16 %v529, %v525
        %v626 = vpack.c.b16 %v534, %v530
        %v627 = vpack.c.b16 %v535, %v531
        %v628 = vpack.c.b16 %v536, %v532
        %v629 = vpack.c.b16 %v537, %v533
        %v630 = vpack.c.b16 %v542, %v538
        %v631 = vpack.c.b16 %v543, %v539
        %v632 = vpack.c.b16 %v544, %v540
        %v633 = vpack.c.b16 %v545, %v541
        %v634 = vpack.c.b16 %v550, %v546
        %v635 = vpack.c.b16 %v551, %v547
        %v636 = vpack.c.b16 %v552, %v548
        %v637 = vpack.c.b16 %v553, %v549
        %v638 = vpack.c.b16 %v558, %v554
        %v639 = vpack.c.b16 %v559, %v555
        %v640 = vpack.c.b16 %v560, %v556
        %v641 = vpack.c.b16 %v561, %v557
        %v642 = vpack.c.b16 %v566, %v562
        %v643 = vpack.c.b16 %v567, %v563
        %v644 = vpack.c.b16 %v568, %v564
        %v645 = vpack.c.b16 %v569, %v565
        %v646 = vpack.c.b16 %v574, %v570
        %v647 = vpack.c.b16 %v575, %v571
        %v648 = vpack.c.b16 %v576, %v572
        %v649 = vpack.c.b16 %v577, %v573
        %v650 = vpack.c.b16 %v582, %v578
        %v651 = vpack.c.b16 %v583, %v579
        %v652 = vpack.c.b16 %v584, %v580
        %v653 = vpack.c.b16 %v585, %v581
        %v654 = vpack.c.b16 %v590, %v586
        %v655 = vpack.c.b16 %v591, %v587
        %v656 = vpack.c.b16 %v592, %v588
        %v657 = vpack.c.b16 %v593, %v589
        %722 = vmatprep.subr.bf16.mxu0 %v623
        %723 = vmatpush1.bf16.xpose.msra.mxu0 %v622
        %724 = vmatprep.subr.bf16.mxu0 %v619
        %725 = vmatpush1.bf16.xpose.msra.mxu0 %v618
        %726 = vmatprep.subr.bf16.mxu0 %v615
        %727 = vmatpush1.bf16.xpose.msra.mxu0 %v614
        %728 = vmatprep.subr.bf16.mxu0 %v611
        %729 = vmatpush1.bf16.xpose.msra.mxu0 %v610
        %730 = vmatprep.subr.bf16.mxu0 %v607
        %731 = vmatpush1.bf16.xpose.msra.mxu0 %v606
        %732 = vmatprep.subr.bf16.mxu0 %v603
        %733 = vmatpush1.bf16.xpose.msra.mxu0 %v602
        %734 = vmatprep.subr.bf16.mxu0 %v599
        %735 = vmatpush1.bf16.xpose.msra.mxu0 %v598
        %736 = vmatprep.subr.bf16.mxu0 %v595
        %737 = vmatpush1.bf16.xpose.msra.mxu0 %v594
        %738 = vmatprep.subr.bf16.mxu0 %v655
        %739 = vmatpush2.bf16.xpose.msra.mxu0 %v654
        %740 = vmatprep.subr.bf16.mxu0 %v651
        %741 = vmatpush2.bf16.xpose.msra.mxu0 %v650
        %742 = vmatprep.subr.bf16.mxu0 %v647
        %743 = vmatpush2.bf16.xpose.msra.mxu0 %v646
        %744 = vmatprep.subr.bf16.mxu0 %v643
        %745 = vmatpush2.bf16.xpose.msra.mxu0 %v642
        %746 = vmatprep.subr.bf16.mxu0 %v639
        %747 = vmatpush2.bf16.xpose.msra.mxu0 %v638
        %748 = vmatprep.subr.bf16.mxu0 %v635
        %749 = vmatpush2.bf16.xpose.msra.mxu0 %v634
        %750 = vmatprep.subr.bf16.mxu0 %v631
        %751 = vmatpush2.bf16.xpose.msra.mxu0 %v630
        %752 = vmatprep.subr.bf16.mxu0 %v627
        %753 = vmatpush2.bf16.xpose.msra.mxu0 %v626
        %754 = vmatprep.mubr.bf16.mxu0 %v395
        %755 = vmatmul.mubr.bf16.gmra.mxu0 %v394
        %v756 = vpop.f32.mrf.mxu0
        %v757 = vadd.f32 0.0, %v756
        %v758 = vpop.f32.mrf.mxu0
        %v759 = vadd.f32 0.0, %v758
        %v760 = vpop.f32.mrf.mxu0
        %v761 = vadd.f32 0.0, %v760
        %v762 = vpop.f32.mrf.mxu0
        %v763 = vadd.f32 0.0, %v762
        %764 = vdwg.mxu0
        %765 = vmatprep.subr.bf16.mxu0 %v625
        %766 = vmatpush1.bf16.xpose.msra.mxu0 %v624
        %767 = vmatprep.subr.bf16.mxu0 %v621
        %768 = vmatpush1.bf16.xpose.msra.mxu0 %v620
        %769 = vmatprep.subr.bf16.mxu0 %v617
        %770 = vmatpush1.bf16.xpose.msra.mxu0 %v616
        %771 = vmatprep.subr.bf16.mxu0 %v613
        %772 = vmatpush1.bf16.xpose.msra.mxu0 %v612
        %773 = vmatprep.subr.bf16.mxu0 %v609
        %774 = vmatpush1.bf16.xpose.msra.mxu0 %v608
        %775 = vmatprep.subr.bf16.mxu0 %v605
        %776 = vmatpush1.bf16.xpose.msra.mxu0 %v604
        %777 = vmatprep.subr.bf16.mxu0 %v601
        %778 = vmatpush1.bf16.xpose.msra.mxu0 %v600
        %779 = vmatprep.subr.bf16.mxu0 %v597
        %780 = vmatpush1.bf16.xpose.msra.mxu0 %v596
        %781 = vmatprep.subr.bf16.mxu0 %v657
        %782 = vmatpush2.bf16.xpose.msra.mxu0 %v656
        %783 = vmatprep.subr.bf16.mxu0 %v653
        %784 = vmatpush2.bf16.xpose.msra.mxu0 %v652
        %785 = vmatprep.subr.bf16.mxu0 %v649
        %786 = vmatpush2.bf16.xpose.msra.mxu0 %v648
        %787 = vmatprep.subr.bf16.mxu0 %v645
        %788 = vmatpush2.bf16.xpose.msra.mxu0 %v644
        %789 = vmatprep.subr.bf16.mxu0 %v641
        %790 = vmatpush2.bf16.xpose.msra.mxu0 %v640
        %791 = vmatprep.subr.bf16.mxu0 %v637
        %792 = vmatpush2.bf16.xpose.msra.mxu0 %v636
        %793 = vmatprep.subr.bf16.mxu0 %v633
        %794 = vmatpush2.bf16.xpose.msra.mxu0 %v632
        %795 = vmatprep.subr.bf16.mxu0 %v629
        %796 = vmatpush2.bf16.xpose.msra.mxu0 %v628
        %797 = vmatprep.mubr.bf16.mxu0 %v397
        %798 = vmatmul.mubr.bf16.gmra.mxu0 %v396
        %v799 = vpop.f32.mrf.mxu0
        %v800 = vadd.f32 %v757, %v799
        %v801 = vpop.f32.mrf.mxu0
        %v802 = vadd.f32 %v759, %v801
        %v803 = vpop.f32.mrf.mxu0
        %v804 = vadd.f32 %v761, %v803
        %v805 = vpop.f32.mrf.mxu0
        %v806 = vadd.f32 %v763, %v805
        %807 = vdwg.mxu0
        %v808 = vadd.f32 %v310, %v800
        %v809 = vadd.f32 %v311, %v802
        %v810 = vadd.f32 %v312, %v804
        %v811 = vadd.f32 %v313, %v806
        %812 = vst [vmem:[#allocation2] sm:$0xff] %v808
        %813 = vst [vmem:[#allocation2 + $0x8] sm:$0xff] %v809
        %814 = vst [vmem:[#allocation2 + $0x10] sm:$0xff] %v810
        %815 = vst [vmem:[#allocation2 + $0x18] sm:$0xff] %v811
        %p816 = scmp.eq.s32.totalorder %s30, 1
        // Predicated region
        $region49: #{tpu_custom_call.1} parent=31 // pred_check
          %p817 = pneg %p816
        $region50: #{tpu_custom_call.1} parent=31 // pred_check_branch
          %819 = sbr.rel (%p817) target = $region52
        $region51: #{tpu_custom_call.1} parent=31 // pred_region
          %v820 = vld [vmem:[#allocation2] sm:$0xff]
          %v821 = vld [vmem:[#allocation2 + $0x8] sm:$0xff]
          %v822 = vld [vmem:[#allocation2 + $0x10] sm:$0xff]
          %v823 = vld [vmem:[#allocation2 + $0x18] sm:$0xff]
          %v824 = vld [vmem:[%s262] sm:$0x3]
          %v826 = vlaneseq
          %v827 = vshrl.u32 %v826, 7
          %v828 = vsub.s32 0, %v827
          %v829 = vrot.slane %v824, %v828
          %v830 = vlaneseq
          %v831 = vshrl.u32 %v830, 7
          %v832 = vsub.s32 1, %v831
          %v833 = vrot.slane %v824, %v832
          %v836 = vadd.f32 %v820, %v829
          %v837 = vadd.f32 %v821, %v833
          %v838 = vadd.f32 %v822, %v829
          %v839 = vadd.f32 %v823, %v833
          %v840 = vmax.f32 %v836, 0.0
          %v841 = vmax.f32 %v837, 0.0
          %v842 = vmax.f32 %v838, 0.0
          %v843 = vmax.f32 %v839, 0.0
          %844 = vst [vmem:[%s294] sm:$0xff] %v840
          %845 = vst [vmem:[%s294 + $0x8] sm:$0xff] %v841
          %846 = vst [vmem:[%s294 + $0x10] sm:$0xff] %v842
          %847 = vst [vmem:[%s294 + $0x18] sm:$0xff] %v843
        $region52: #{tpu_custom_call.1} parent=31 // pred_fallthru
          _
        %s848 = sand.u32 %s134, 1
        %s849 = scalar_lea.sflag [#allocation5], %s848
        %s850 = sand.u32 %s134, 1
        %s851 = smul.addr %s850, 32
        %s852 = scalar_lea.vmem [#allocation9], %s851
        // Predicated region
        $region53: #{tpu_custom_call.1} parent=31 // pred_check
          %p853 = pneg %p144
        $region54: #{tpu_custom_call.1} parent=31 // pred_check_branch
          %855 = sbr.rel (%p853) target = $region56
        $region55: #{tpu_custom_call.1} parent=31 // pred_region
          %s856 = smul.u32 2, %s28
          %s857 = smul.u32 2, %s29
          %s859 = ssub.s32 512, 512
          %860 = vsyncadd %s849, %s859
          %s861 = smul.addr %s856, 4
          %s862 = sadd.s32 %s857, %s861
          %s863 = smul.addr %s862, 128
          %s864 = scalar_lea.hbm %s3, %s863
          %s865 = sshll.u32 %s852, 4
          %s866 = int_to_ptr.vmem [resolvable:$true] %s865
          %871 = dma.vmem_to_hbm [thread:$0]  %s866, 512, %s864, %s849, 256, 512, 16
        $region56: #{tpu_custom_call.1} parent=31 // pred_fallthru
          _
      $region32: #{tpu_custom_call.1} parent=5 // pred_fallthru
        _
      %p872 = scmp.le.s32.totalorder 2, %s18
      // Predicated region
      $region57: #{tpu_custom_call.1} parent=5 // pred_check
        %p873 = pneg %p872
      $region58: #{tpu_custom_call.1} parent=5 // pred_check_branch
        %875 = sbr.rel (%p873) target = $region60
      $region59: #{tpu_custom_call.1} parent=5 // pred_region
        %s876 = ssub.s32 %s18, 2
        // Predicated region
        $region61: #{tpu_custom_call.1} parent=59 // pred_check
          %p877 = pneg %p150
        $region62: #{tpu_custom_call.1} parent=59 // pred_check_branch
          %879 = sbr.rel (%p877) target = $region64
        $region63: #{tpu_custom_call.1} parent=59 // pred_region
          %s880 = sand.u32 %s135, 1
          %s881 = scalar_lea.sflag [#allocation5], %s880
          %s882 = sand.u32 %s135, 1
          %s883 = smul.addr %s882, 32
          %s884 = scalar_lea.vmem [#allocation9], %s883
          %885 = dma.done %s881, 512
        $region64: #{tpu_custom_call.1} parent=59 // pred_fallthru
          _
      $region60: #{tpu_custom_call.1} parent=5 // pred_fallthru
        _
    $region6: #{tpu_custom_call.1} parent=1 // loop_footer
      %s22 = sadd.s32 1, %s18
    $region7: #{tpu_custom_call.1} parent=1 // loop_footer_branch
      %17 = sbr.rel target = $region3
    $region8: #{tpu_custom_call.1} parent=1 // loop_exit
      _
    %886 = vsyncpa [#allocation4], 1
    %s887 = scalar_lea.sflag [#allocation4], 1
    %888 = vsyncpa %s887, 1
    %889 = vsyncpa [#allocation7], 1
    %s890 = scalar_lea.sflag [#allocation7], 1
    %891 = vsyncpa %s890, 1
    %892 = vsyncpa [#allocation5], 1
    %s893 = scalar_lea.sflag [#allocation5], 1
    %894 = vsyncpa %s893, 1

</llo_original>
